<compile_context>
chip_gen: v7x
topology: tpu7x:2x2x1
jax: 0.10.0
libtpu: 0.0.40
codegen_flags: <defaults>
</compile_context>

<pallas_src>
import numpy as np
import jax
import jax.numpy as jnp
from jax.experimental import pallas as pl
from jax.experimental.pallas import tpu as pltpu

# ---------------- model dimensions ----------------
L  = 2      # num_layers
E  = 32     # input_size
H  = 32     # rnn_size
B  = 4      # batch
BP = 8      # batch padded to a full sublane tile
DROPOUT = 0.0   # p = 0.0 -> nn.Dropout is identity


# ---------------- Pallas StackedGRU kernel (fused over T decode steps) ----------------
def stacked_gru_kernel(x_ref, h0_ref, wx_ref, wh_ref, b_ref, y_ref, h1_ref):
    # x_ref : (1, BP, E)      input at grid step t (streamed)
    # h0_ref: (L, BP, H)      initial hidden (VMEM-resident, read once)
    # wx_ref: (L, E, 4H)      fused input weights  [r | z | n_in | 0]   (resident)
    # wh_ref: (L, H, 4H)      fused hidden weights [r | z | 0 | n_hid]  (resident)
    # b_ref : (L, BP, 4H)     fused, pre-broadcast biases               (resident)
    # y_ref : (1, BP, H)      per-step output (= last layer hidden)     (streamed)
    # h1_ref: (L, BP, H)      carried stacked hidden; revisited output, one HBM write
    t = pl.program_id(0)

    @pl.when(t == 0)
    def _():
        h1_ref[...] = h0_ref[...]

    # keep padded batch rows exactly zero (important: h1 is aliased to h0)
    row_mask = jax.lax.broadcasted_iota(jnp.int32, (BP, 1), 0) < B

    inp = x_ref[0]                                           # (BP, E)
    for l in range(L):                                       # static unroll over layers
        h = h1_ref[l]                                        # (BP, H)
        g = (jnp.dot(inp, wx_ref[l], preferred_element_type=jnp.float32)
             + jnp.dot(h, wh_ref[l], preferred_element_type=jnp.float32)
             + b_ref[l])                                     # (BP, 4H) = (8, 128)

        rz = jax.nn.sigmoid(g[:, :2 * H])                    # one 64-lane sigmoid
        r = rz[:, :H]
        z = rz[:, H:]
        n = jnp.tanh(g[:, 2 * H:3 * H] + r * g[:, 3 * H:])
        h_new = (1.0 - z) * n + z * h                        # GRUCell update
        h_new = jnp.where(row_mask, h_new, 0.0)              # keep pad rows clean

        h1_ref[l] = h_new
        inp = h_new
        # dropout(p=0.0) between layers is identity.
        # TODO(synk): training-mode dropout (p > 0) would need pltpu.prng_* here.

    y_ref[0] = inp


# ---------------- one-time weight fusion (OUT of the hot path) ----------------
def fuse_stacked_gru_params(params):
    """PyTorch GRUCell weights (gate order r, z, n) -> per-layer fused slabs.

    w_x (L, E, 4H): columns [W_ir^T | W_iz^T | W_in^T | 0]
    w_h (L, H, 4H): columns [W_hr^T | W_hz^T | 0      | W_hn^T]
    b   (L, BP,4H): columns [b_ir+b_hr | b_iz+b_hz | b_in | b_hn], pre-broadcast.

    Two dots summed give one (BP, 4H) pre-activation per layer while keeping
    the hidden n-term separate for the r * (W_hn h + b_hn) product.
    """
    assert E == H, "fused stacked layout requires input_size == rnn_size"
    wx, wh, bb = [], [], []
    for l in range(L):
        wi = jnp.transpose(params["w_ih"][l]).astype(jnp.float32)   # (E, 3H)
        wo = jnp.transpose(params["w_hh"][l]).astype(jnp.float32)   # (H, 3H)
        wx.append(jnp.concatenate(
            [wi[:, :2 * H], wi[:, 2 * H:], jnp.zeros((E, H), jnp.float32)], axis=1))
        wh.append(jnp.concatenate(
            [wo[:, :2 * H], jnp.zeros((H, H), jnp.float32), wo[:, 2 * H:]], axis=1))
        b = jnp.concatenate(
            [params["b_ih"][l][:2 * H] + params["b_hh"][l][:2 * H],
             params["b_ih"][l][2 * H:], params["b_hh"][l][2 * H:]]).astype(jnp.float32)
        bb.append(jnp.broadcast_to(b.reshape(1, 4 * H), (BP, 4 * H)))
    return dict(w_x=jnp.stack(wx),      # (L, E, 4H)
                w_h=jnp.stack(wh),      # (L, H, 4H)
                b=jnp.stack(bb))        # (L, BP, 4H)


# ---------------- hot-path wrapper: one launch for T decoder steps ----------------
def stacked_gru_pallas(xs_p, h0_p, fused):
    """xs_p: (T, BP, E) padded inputs, h0_p: (L, BP, H) padded hidden.

    Returns (ys_p (T, BP, H), h1_p (L, BP, H)): per-step outputs of the last
    layer and the final stacked hidden state.  T == 1 is exactly
    StackedGRU.forward(input, hidden) for one decoder step.
    """
    T = xs_p.shape[0]
    grid_spec = pltpu.PrefetchScalarGridSpec(
        num_scalar_prefetch=0,
        grid=(T,),
        in_specs=[
            pl.BlockSpec((1, BP, E),      lambda t: (t, 0, 0)),   # x_t streamed
            pl.BlockSpec((L, BP, H),      lambda t: (0, 0, 0)),   # h0 resident
            pl.BlockSpec((L, E, 4 * H),   lambda t: (0, 0, 0)),   # w_x resident
            pl.BlockSpec((L, H, 4 * H),   lambda t: (0, 0, 0)),   # w_h resident
            pl.BlockSpec((L, BP, 4 * H),  lambda t: (0, 0, 0)),   # bias resident
        ],
        out_specs=(
            pl.BlockSpec((1, BP, H),      lambda t: (t, 0, 0)),   # y_t streamed
            pl.BlockSpec((L, BP, H),      lambda t: (0, 0, 0)),   # h1 carried, 1 write
        ),
    )
    return pl.pallas_call(
        stacked_gru_kernel,
        grid_spec=grid_spec,
        out_shape=(
            jax.ShapeDtypeStruct((T, BP, H), jnp.float32),
            jax.ShapeDtypeStruct((L, BP, H), jnp.float32),
        ),
        input_output_aliases={1: 1},     # update hidden state in place
        compiler_params=pltpu.CompilerParams(
            dimension_semantics=("arbitrary",)),   # time is a recurrence
    )(xs_p, h0_p, fused["w_x"], fused["w_h"], fused["b"])


# ---------------- deterministic parameter init ----------------
def init_params(key):
    keys = jax.random.split(key, 4 * L)
    bound = 1.0 / np.sqrt(H)
    w_ih, w_hh, b_ih, b_hh = [], [], [], []
    for l in range(L):
        in_dim = E if l == 0 else H
        w_ih.append(jax.random.uniform(keys[4 * l + 0], (3 * H, in_dim),
                                       jnp.float32, -bound, bound))
        w_hh.append(jax.random.uniform(keys[4 * l + 1], (3 * H, H),
                                       jnp.float32, -bound, bound))
        b_ih.append(jax.random.uniform(keys[4 * l + 2], (3 * H,),
                                       jnp.float32, -bound, bound))
        b_hh.append(jax.random.uniform(keys[4 * l + 3], (3 * H,),
                                       jnp.float32, -bound, bound))
    return dict(w_ih=jnp.stack(w_ih), w_hh=jnp.stack(w_hh),
                b_ih=jnp.stack(b_ih), b_hh=jnp.stack(b_hh))


# ---------------- pure-JAX reference (mirrors PyTorch GRUCell / StackedGRU) ----------------
def gru_cell_ref(x, h, w_ih, w_hh, b_ih, b_hh):
    gi = x @ w_ih.T + b_ih
    gh = h @ w_hh.T + b_hh
    r = jax.nn.sigmoid(gi[:, :H] + gh[:, :H])
    z = jax.nn.sigmoid(gi[:, H:2 * H] + gh[:, H:2 * H])
    n = jnp.tanh(gi[:, 2 * H:] + r * gh[:, 2 * H:])
    return (1.0 - z) * n + z * h


def stacked_gru_reference(x, hidden, params):
    inp = x
    h1 = []
    for l in range(L):
        h_new = gru_cell_ref(inp, hidden[l], params["w_ih"][l], params["w_hh"][l],
                             params["b_ih"][l], params["b_hh"][l])
        inp = h_new                         # dropout(p=0.0) identity between layers
        h1.append(h_new)
    return inp, jnp.stack(h1)


if __name__ == "__main__":
    key = jax.random.PRNGKey(0)
    kp, kx, kh = jax.random.split(key, 3)
    params = init_params(kp)
    fused = fuse_stacked_gru_params(params)          # one-time, outside the hot path

    T = 8
    xs = jax.random.normal(kx, (T, B, E), jnp.float32)       # decoder-step inputs
    hidden = jax.random.normal(kh, (L, B, H), jnp.float32)   # per-layer hidden state

    # One-time padding to full sublane tiles; this padded layout is what a real
    # decode loop would keep between steps (no per-call pad/slice in the hot path).
    xs_p = jnp.zeros((T, BP, E), jnp.float32).at[:, :B].set(xs)
    h0_p = jnp.zeros((L, BP, H), jnp.float32).at[:, :B].set(hidden)

    fwd = jax.jit(stacked_gru_pallas)

    # --- single step: exact StackedGRU.forward semantics (T == 1) ---
    ys1_p, h1_1p = fwd(xs_p[:1], h0_p, fused)
    jax.block_until_ready((ys1_p, h1_1p))
    out_r, h1_r = stacked_gru_reference(xs[0], hidden, params)
    np.testing.assert_allclose(np.asarray(ys1_p[0, :B]), np.asarray(out_r),
                               rtol=1e-5, atol=1e-5)
    np.testing.assert_allclose(np.asarray(h1_1p[:, :B]), np.asarray(h1_r),
                               rtol=1e-5, atol=1e-5)

    # --- fused T-step decode loop: one launch, weights resident across steps ---
    ys_p, hT_p = fwd(xs_p, h0_p, fused)
    jax.block_until_ready((ys_p, hT_p))

    h_ref = hidden
    for t in range(T):
        out_t, h_ref = stacked_gru_reference(xs[t], h_ref, params)
        np.testing.assert_allclose(np.asarray(ys_p[t, :B]), np.asarray(out_t),
                                   rtol=2e-5, atol=2e-5)
    np.testing.assert_allclose(np.asarray(hT_p[:, :B]), np.asarray(h_ref),
                               rtol=2e-5, atol=2e-5)

    print("KERNEL_OK")
</pallas_src>

<mosaic_0001>
module attributes {stable_mosaic.version = 11 : i64} {
  func.func @stacked_gru_kernel(%arg0: i32, %arg1: memref<1x8x32xf32, #tpu.memory_space<vmem>>, %arg2: memref<2x8x32xf32, #tpu.memory_space<vmem>>, %arg3: memref<2x32x128xf32, #tpu.memory_space<vmem>>, %arg4: memref<2x32x128xf32, #tpu.memory_space<vmem>>, %arg5: memref<2x8x128xf32, #tpu.memory_space<vmem>>, %arg6: memref<1x8x32xf32, #tpu.memory_space<vmem>>, %arg7: memref<2x8x32xf32, #tpu.memory_space<vmem>>) attributes {dimension_semantics = [#tpu.dimension_semantics<arbitrary>], iteration_bounds = array<i64: 1>, scalar_prefetch = 0 : i64, scratch_operands = 0 : i64, tpu.core_type = #tpu.core_type<tc>, window_params = [{transform_indices = @transform_0, window_bounds = array<i64: 1, 8, 32>}, {pipeline_mode = #tpu.pipeline_mode<synchronous>, transform_indices = @transform_1, window_bounds = array<i64: 2, 8, 32>}, {pipeline_mode = #tpu.pipeline_mode<synchronous>, transform_indices = @transform_2, window_bounds = array<i64: 2, 32, 128>}, {pipeline_mode = #tpu.pipeline_mode<synchronous>, transform_indices = @transform_3, window_bounds = array<i64: 2, 32, 128>}, {pipeline_mode = #tpu.pipeline_mode<synchronous>, transform_indices = @transform_4, window_bounds = array<i64: 2, 8, 128>}, {transform_indices = @transform_5, window_bounds = array<i64: 1, 8, 32>}, {pipeline_mode = #tpu.pipeline_mode<synchronous>, transform_indices = @transform_6, window_bounds = array<i64: 2, 8, 32>}]} {
    %c0_i32 = arith.constant 0 : i32
    %0 = arith.cmpi eq, %arg0, %c0_i32 : i32
    %1 = arith.extui %0 : i1 to i32
    %c0_i32_0 = arith.constant 0 : i32
    %2 = arith.cmpi ne, %1, %c0_i32_0 : i32
    scf.if %2 {
      %c0_44 = arith.constant 0 : index
      %c0_45 = arith.constant 0 : index
      %c0_46 = arith.constant 0 : index
      %85 = vector.load %arg2[%c0_44, %c0_45, %c0_46] : memref<2x8x32xf32, #tpu.memory_space<vmem>>, vector<2x8x32xf32>
      %c0_47 = arith.constant 0 : index
      %c0_48 = arith.constant 0 : index
      %c0_49 = arith.constant 0 : index
      %86 = vector.load %arg7[%c0_47, %c0_48, %c0_49] : memref<2x8x32xf32, #tpu.memory_space<vmem>>, vector<2x8x32xf32>
      tpu.vector_store %arg7[%c0_47, %c0_48, %c0_49], %85 {strides = array<i32>} : memref<2x8x32xf32, #tpu.memory_space<vmem>>, vector<2x8x32xf32>,
    } else {
    }
    %3 = tpu.iota {dimensions = array<i32: 0>} : vector<8x1xi32>
    %c4_i32 = arith.constant 4 : i32
    %4 = vector.broadcast %c4_i32 : i32 to vector<8x1xi32>
    %5 = arith.cmpi slt, %3, %4 : vector<8x1xi32>
    %c0 = arith.constant 0 : index
    %c0_1 = arith.constant 0 : index
    %c0_2 = arith.constant 0 : index
    %6 = vector.load %arg1[%c0, %c0_1, %c0_2] : memref<1x8x32xf32, #tpu.memory_space<vmem>>, vector<1x8x32xf32>
    %7 = vector.shape_cast %6 : vector<1x8x32xf32> to vector<8x32xf32>
    %c0_3 = arith.constant 0 : index
    %c0_4 = arith.constant 0 : index
    %c0_5 = arith.constant 0 : index
    %8 = vector.load %arg7[%c0_3, %c0_4, %c0_5] : memref<2x8x32xf32, #tpu.memory_space<vmem>>, vector<1x8x32xf32>
    %9 = vector.shape_cast %8 : vector<1x8x32xf32> to vector<8x32xf32>
    %c0_6 = arith.constant 0 : index
    %c0_7 = arith.constant 0 : index
    %c0_8 = arith.constant 0 : index
    %10 = vector.load %arg3[%c0_6, %c0_7, %c0_8] : memref<2x32x128xf32, #tpu.memory_space<vmem>>, vector<1x32x128xf32>
    %11 = vector.shape_cast %10 : vector<1x32x128xf32> to vector<32x128xf32>
    %cst = arith.constant dense<0.000000e+00> : vector<8x128xf32>
    %12 = tpu.matmul %7, %11, %cst {dimension_numbers = #tpu.dot_dimension_numbers<[1], [0], [0], [1], [0, 0, 1, 1], [], []>} : vector<8x32xf32>, vector<32x128xf32>, vector<8x128xf32> -> vector<8x128xf32>
    %c0_9 = arith.constant 0 : index
    %c0_10 = arith.constant 0 : index
    %c0_11 = arith.constant 0 : index
    %13 = vector.load %arg4[%c0_9, %c0_10, %c0_11] : memref<2x32x128xf32, #tpu.memory_space<vmem>>, vector<1x32x128xf32>
    %14 = vector.shape_cast %13 : vector<1x32x128xf32> to vector<32x128xf32>
    %cst_12 = arith.constant dense<0.000000e+00> : vector<8x128xf32>
    %15 = tpu.matmul %9, %14, %cst_12 {dimension_numbers = #tpu.dot_dimension_numbers<[1], [0], [0], [1], [0, 0, 1, 1], [], []>} : vector<8x32xf32>, vector<32x128xf32>, vector<8x128xf32> -> vector<8x128xf32>
    %16 = arith.addf %12, %15 : vector<8x128xf32>
    %c0_13 = arith.constant 0 : index
    %c0_14 = arith.constant 0 : index
    %c0_15 = arith.constant 0 : index
    %17 = vector.load %arg5[%c0_13, %c0_14, %c0_15] : memref<2x8x128xf32, #tpu.memory_space<vmem>>, vector<1x8x128xf32>
    %18 = vector.shape_cast %17 : vector<1x8x128xf32> to vector<8x128xf32>
    %19 = arith.addf %16, %18 : vector<8x128xf32>
    %20 = vector.extract_strided_slice %19 {offsets = [0, 0], sizes = [8, 64], strides = [1, 1]} : vector<8x128xf32> to vector<8x64xf32>
    %21 = arith.negf %20 : vector<8x64xf32>
    %22 = math.exp %21 : vector<8x64xf32>
    %cst_16 = arith.constant 1.000000e+00 : f32
    %23 = vector.broadcast %cst_16 : f32 to vector<8x64xf32>
    %24 = arith.addf %23, %22 : vector<8x64xf32>
    %25 = arith.divf %23, %24 : vector<8x64xf32>
    %26 = vector.extract_strided_slice %25 {offsets = [0, 0], sizes = [8, 32], strides = [1, 1]} : vector<8x64xf32> to vector<8x32xf32>
    %27 = vector.extract_strided_slice %25 {offsets = [0, 32], sizes = [8, 32], strides = [1, 1]} : vector<8x64xf32> to vector<8x32xf32>
    %28 = vector.extract_strided_slice %19 {offsets = [0, 64], sizes = [8, 32], strides = [1, 1]} : vector<8x128xf32> to vector<8x32xf32>
    %29 = vector.extract_strided_slice %19 {offsets = [0, 96], sizes = [8, 32], strides = [1, 1]} : vector<8x128xf32> to vector<8x32xf32>
    %30 = arith.mulf %26, %29 : vector<8x32xf32>
    %31 = arith.addf %28, %30 : vector<8x32xf32>
    %32 = math.tanh %31 : vector<8x32xf32>
    %cst_17 = arith.constant 1.000000e+00 : f32
    %33 = vector.broadcast %cst_17 : f32 to vector<8x32xf32>
    %34 = arith.subf %33, %27 : vector<8x32xf32>
    %35 = arith.mulf %34, %32 : vector<8x32xf32>
    %36 = arith.mulf %27, %9 : vector<8x32xf32>
    %37 = arith.addf %35, %36 : vector<8x32xf32>
    %cst_18 = arith.constant 0.000000e+00 : f32
    %38 = vector.shape_cast %5 : vector<8x1xi1> to vector<8x1xi1>
    %39 = vector.broadcast %38 : vector<8x1xi1> to vector<8x32xi1>
    %40 = vector.broadcast %cst_18 : f32 to vector<8x32xf32>
    %41 = arith.select %39, %37, %40 : vector<8x32xi1>, vector<8x32xf32>
    %c0_19 = arith.constant 0 : index
    %c0_20 = arith.constant 0 : index
    %c0_21 = arith.constant 0 : index
    %42 = vector.load %arg7[%c0_19, %c0_20, %c0_21] : memref<2x8x32xf32, #tpu.memory_space<vmem>>, vector<1x8x32xf32>
    %43 = vector.shape_cast %42 : vector<1x8x32xf32> to vector<8x32xf32>
    %44 = vector.shape_cast %41 : vector<8x32xf32> to vector<1x8x32xf32>
    tpu.vector_store %arg7[%c0_19, %c0_20, %c0_21], %44 {strides = array<i32>} : memref<2x8x32xf32, #tpu.memory_space<vmem>>, vector<1x8x32xf32>,
    %c1 = arith.constant 1 : index
    %c0_22 = arith.constant 0 : index
    %c0_23 = arith.constant 0 : index
    %45 = vector.load %arg7[%c1, %c0_22, %c0_23] : memref<2x8x32xf32, #tpu.memory_space<vmem>>, vector<1x8x32xf32>
    %46 = vector.shape_cast %45 : vector<1x8x32xf32> to vector<8x32xf32>
    %c1_24 = arith.constant 1 : index
    %c0_25 = arith.constant 0 : index
    %c0_26 = arith.constant 0 : index
    %47 = vector.load %arg3[%c1_24, %c0_25, %c0_26] : memref<2x32x128xf32, #tpu.memory_space<vmem>>, vector<1x32x128xf32>
    %48 = vector.shape_cast %47 : vector<1x32x128xf32> to vector<32x128xf32>
    %cst_27 = arith.constant dense<0.000000e+00> : vector<8x128xf32>
    %49 = tpu.matmul %41, %48, %cst_27 {dimension_numbers = #tpu.dot_dimension_numbers<[1], [0], [0], [1], [0, 0, 1, 1], [], []>} : vector<8x32xf32>, vector<32x128xf32>, vector<8x128xf32> -> vector<8x128xf32>
    %c1_28 = arith.constant 1 : index
    %c0_29 = arith.constant 0 : index
    %c0_30 = arith.constant 0 : index
    %50 = vector.load %arg4[%c1_28, %c0_29, %c0_30] : memref<2x32x128xf32, #tpu.memory_space<vmem>>, vector<1x32x128xf32>
    %51 = vector.shape_cast %50 : vector<1x32x128xf32> to vector<32x128xf32>
    %cst_31 = arith.constant dense<0.000000e+00> : vector<8x128xf32>
    %52 = tpu.matmul %46, %51, %cst_31 {dimension_numbers = #tpu.dot_dimension_numbers<[1], [0], [0], [1], [0, 0, 1, 1], [], []>} : vector<8x32xf32>, vector<32x128xf32>, vector<8x128xf32> -> vector<8x128xf32>
    %53 = arith.addf %49, %52 : vector<8x128xf32>
    %c1_32 = arith.constant 1 : index
    %c0_33 = arith.constant 0 : index
    %c0_34 = arith.constant 0 : index
    %54 = vector.load %arg5[%c1_32, %c0_33, %c0_34] : memref<2x8x128xf32, #tpu.memory_space<vmem>>, vector<1x8x128xf32>
    %55 = vector.shape_cast %54 : vector<1x8x128xf32> to vector<8x128xf32>
    %56 = arith.addf %53, %55 : vector<8x128xf32>
    %57 = vector.extract_strided_slice %56 {offsets = [0, 0], sizes = [8, 64], strides = [1, 1]} : vector<8x128xf32> to vector<8x64xf32>
    %58 = arith.negf %57 : vector<8x64xf32>
    %59 = math.exp %58 : vector<8x64xf32>
    %cst_35 = arith.constant 1.000000e+00 : f32
    %60 = vector.broadcast %cst_35 : f32 to vector<8x64xf32>
    %61 = arith.addf %60, %59 : vector<8x64xf32>
    %62 = arith.divf %60, %61 : vector<8x64xf32>
    %63 = vector.extract_strided_slice %62 {offsets = [0, 0], sizes = [8, 32], strides = [1, 1]} : vector<8x64xf32> to vector<8x32xf32>
    %64 = vector.extract_strided_slice %62 {offsets = [0, 32], sizes = [8, 32], strides = [1, 1]} : vector<8x64xf32> to vector<8x32xf32>
    %65 = vector.extract_strided_slice %56 {offsets = [0, 64], sizes = [8, 32], strides = [1, 1]} : vector<8x128xf32> to vector<8x32xf32>
    %66 = vector.extract_strided_slice %56 {offsets = [0, 96], sizes = [8, 32], strides = [1, 1]} : vector<8x128xf32> to vector<8x32xf32>
    %67 = arith.mulf %63, %66 : vector<8x32xf32>
    %68 = arith.addf %65, %67 : vector<8x32xf32>
    %69 = math.tanh %68 : vector<8x32xf32>
    %cst_36 = arith.constant 1.000000e+00 : f32
    %70 = vector.broadcast %cst_36 : f32 to vector<8x32xf32>
    %71 = arith.subf %70, %64 : vector<8x32xf32>
    %72 = arith.mulf %71, %69 : vector<8x32xf32>
    %73 = arith.mulf %64, %46 : vector<8x32xf32>
    %74 = arith.addf %72, %73 : vector<8x32xf32>
    %cst_37 = arith.constant 0.000000e+00 : f32
    %75 = vector.shape_cast %5 : vector<8x1xi1> to vector<8x1xi1>
    %76 = vector.broadcast %75 : vector<8x1xi1> to vector<8x32xi1>
    %77 = vector.broadcast %cst_37 : f32 to vector<8x32xf32>
    %78 = arith.select %76, %74, %77 : vector<8x32xi1>, vector<8x32xf32>
    %c1_38 = arith.constant 1 : index
    %c0_39 = arith.constant 0 : index
    %c0_40 = arith.constant 0 : index
    %79 = vector.load %arg7[%c1_38, %c0_39, %c0_40] : memref<2x8x32xf32, #tpu.memory_space<vmem>>, vector<1x8x32xf32>
    %80 = vector.shape_cast %79 : vector<1x8x32xf32> to vector<8x32xf32>
    %81 = vector.shape_cast %78 : vector<8x32xf32> to vector<1x8x32xf32>
    tpu.vector_store %arg7[%c1_38, %c0_39, %c0_40], %81 {strides = array<i32>} : memref<2x8x32xf32, #tpu.memory_space<vmem>>, vector<1x8x32xf32>,
    %c0_41 = arith.constant 0 : index
    %c0_42 = arith.constant 0 : index
    %c0_43 = arith.constant 0 : index
    %82 = vector.load %arg6[%c0_41, %c0_42, %c0_43] : memref<1x8x32xf32, #tpu.memory_space<vmem>>, vector<1x8x32xf32>
    %83 = vector.shape_cast %82 : vector<1x8x32xf32> to vector<8x32xf32>
    %84 = vector.shape_cast %78 : vector<8x32xf32> to vector<1x8x32xf32>
    tpu.vector_store %arg6[%c0_41, %c0_42, %c0_43], %84 {strides = array<i32>} : memref<1x8x32xf32, #tpu.memory_space<vmem>>, vector<1x8x32xf32>,
    return
  }
  func.func @transform_0(%arg0: i32) -> (i32, i32, i32) {
    %c0_i32 = arith.constant 0 : i32
    %c0_i32_0 = arith.constant 0 : i32
    %c0_i32_1 = arith.constant 0 : i32
    return %arg0, %c0_i32, %c0_i32_0 : i32, i32, i32
  }
  func.func @transform_1(%arg0: i32) -> (i32, i32, i32) {
    %c0_i32 = arith.constant 0 : i32
    %c0_i32_0 = arith.constant 0 : i32
    %c0_i32_1 = arith.constant 0 : i32
    %c0_i32_2 = arith.constant 0 : i32
    return %c0_i32, %c0_i32_0, %c0_i32_1 : i32, i32, i32
  }
  func.func @transform_2(%arg0: i32) -> (i32, i32, i32) {
    %c0_i32 = arith.constant 0 : i32
    %c0_i32_0 = arith.constant 0 : i32
    %c0_i32_1 = arith.constant 0 : i32
    %c0_i32_2 = arith.constant 0 : i32
    return %c0_i32, %c0_i32_0, %c0_i32_1 : i32, i32, i32
  }
  func.func @transform_3(%arg0: i32) -> (i32, i32, i32) {
    %c0_i32 = arith.constant 0 : i32
    %c0_i32_0 = arith.constant 0 : i32
    %c0_i32_1 = arith.constant 0 : i32
    %c0_i32_2 = arith.constant 0 : i32
    return %c0_i32, %c0_i32_0, %c0_i32_1 : i32, i32, i32
  }
  func.func @transform_4(%arg0: i32) -> (i32, i32, i32) {
    %c0_i32 = arith.constant 0 : i32
    %c0_i32_0 = arith.constant 0 : i32
    %c0_i32_1 = arith.constant 0 : i32
    %c0_i32_2 = arith.constant 0 : i32
    return %c0_i32, %c0_i32_0, %c0_i32_1 : i32, i32, i32
  }
  func.func @transform_5(%arg0: i32) -> (i32, i32, i32) {
    %c0_i32 = arith.constant 0 : i32
    %c0_i32_0 = arith.constant 0 : i32
    %c0_i32_1 = arith.constant 0 : i32
    return %arg0, %c0_i32, %c0_i32_0 : i32, i32, i32
  }
  func.func @transform_6(%arg0: i32) -> (i32, i32, i32) {
    %c0_i32 = arith.constant 0 : i32
    %c0_i32_0 = arith.constant 0 : i32
    %c0_i32_1 = arith.constant 0 : i32
    %c0_i32_2 = arith.constant 0 : i32
    return %c0_i32, %c0_i32_0, %c0_i32_1 : i32, i32, i32
  }
}

</mosaic_0001>

<llo_original>
// kernel: stacked_gru_pallas.1
$region0: #{stacked_gru_pallas.1}
  #allocation0 [shape = 'u32[]', space=smem, size = 0x4, offset = 0x4, fixed_abs, tag = 'smem constant byte address 0x4 - core index']
  #allocation1 [shape = 'u32[144,128]{1,0:T(1,128)}', space=vmem, size = 0x12000, scoped, tag = 'internal scratch']
  %s0 = inlined_call_operand.vmem [shape: f32[1,8,32], index: 0, kind: input, shape index: {}]
  %s1 = inlined_call_operand.hbm [shape: f32[2,8,32], index: 1, kind: input, shape index: {}, may-alias: {1,6}]
  %s2 = inlined_call_operand.hbm [shape: f32[2,32,128], index: 2, kind: input, shape index: {}]
  %s3 = inlined_call_operand.hbm [shape: f32[2,32,128], index: 3, kind: input, shape index: {}]
  %s4 = inlined_call_operand.vmem [shape: f32[2,8,128], index: 4, kind: input, shape index: {}]
  %s5 = inlined_call_operand.hbm [shape: f32[1,8,32], index: 5, kind: output, shape index: {0}]
  %s6 = inlined_call_operand.hbm [shape: f32[2,8,32], index: 6, kind: output, shape index: {1}, may-alias: {1,6}]
  %7 = xla_tuple %s5, %s6
  %s8 = sld [smem:[#allocation0]]
  $region54: #{stacked_gru_pallas.1} parent=0
    _
  %s10 = ssub.s32 1, %s8
  %s11 = scalar_select 0, %s10, %s8
  $region1: #{stacked_gru_pallas.1} parent=0
    #allocation2 [shape = 'u8[8192]{0}', space=vmem, size = 0x2000, scoped, tag = 'input window, operand 1, single buffered']
    #allocation3 [shape = 's32[1]{0}', space=sflag, size = 0x4, scoped, tag = 'scoped memory for stacked_gru_pallas.1']
    #allocation4 [shape = 's32[1]{0}', space=sflag, size = 0x4, scoped, tag = 'scoped memory for stacked_gru_pallas.1']
    #allocation5 [shape = 'u8[32768]{0}', space=vmem, size = 0x8000, scoped, tag = 'input window, operand 2, single buffered']
    #allocation6 [shape = 's32[1]{0}', space=sflag, size = 0x4, scoped, tag = 'scoped memory for stacked_gru_pallas.1']
    #allocation7 [shape = 'u8[32768]{0}', space=vmem, size = 0x8000, scoped, tag = 'input window, operand 3, single buffered']
    #allocation8 [shape = 'u8[4096]{0}', space=vmem, size = 0x1000, scoped, tag = 'output window, operand 0, single buffered']
    #allocation9 [shape = 'u8[8192]{0}', space=vmem, size = 0x2000, scoped, tag = 'output window, operand 1, single buffered']
    #allocation10 [shape = 's32[1]{0}', space=sflag, size = 0x4, scoped, tag = 'scoped memory for stacked_gru_pallas.1']
    %12 = vsyncpa [#allocation3], 0
    %13 = vsyncpa [#allocation6], 0
    %14 = vsyncpa [#allocation4], 0
    %15 = vsyncpa [#allocation10], 0
    // Predicated region
    $region2: #{stacked_gru_pallas.1} parent=1 // pred_check
      _
    $region3: #{stacked_gru_pallas.1} parent=1 // pred_check_branch
      %17 = sbr.rel (0) target = $region5
    $region4: #{stacked_gru_pallas.1} parent=1 // pred_region
      _
    $region5: #{stacked_gru_pallas.1} parent=1 // pred_fallthru
      _
    // Predicated region
    $region6: #{stacked_gru_pallas.1} parent=1 // pred_check
      _
    $region7: #{stacked_gru_pallas.1} parent=1 // pred_check_branch
      %19 = sbr.rel (0) target = $region9
    $region8: #{stacked_gru_pallas.1} parent=1 // pred_region
      %s21 = ssub.s32 256, 256
      %22 = vsyncadd [#allocation3], %s21
      %s23 = sshll.u32 [#allocation2], 4
      %s24 = int_to_ptr.vmem [resolvable:$true] %s23
      %29 = dma.hbm_to_vmem [thread:$0]  %s1, 256, %s24, [#allocation3], 128, 128, 8
    $region9: #{stacked_gru_pallas.1} parent=1 // pred_fallthru
      _
    // Predicated region
    $region10: #{stacked_gru_pallas.1} parent=1 // pred_check
      _
    $region11: #{stacked_gru_pallas.1} parent=1 // pred_check_branch
      %31 = sbr.rel (0) target = $region13
    $region12: #{stacked_gru_pallas.1} parent=1 // pred_region
      %s33 = ssub.s32 1024, 1024
      %34 = vsyncadd [#allocation6], %s33
      %s35 = sshll.u32 [#allocation5], 4
      %s36 = int_to_ptr.vmem [resolvable:$true] %s35
      %41 = dma.hbm_to_vmem [thread:$0]  %s2, 1024, %s36, [#allocation6], 128, 128, 8
    $region13: #{stacked_gru_pallas.1} parent=1 // pred_fallthru
      _
    // Predicated region
    $region14: #{stacked_gru_pallas.1} parent=1 // pred_check
      _
    $region15: #{stacked_gru_pallas.1} parent=1 // pred_check_branch
      %43 = sbr.rel (0) target = $region17
    $region16: #{stacked_gru_pallas.1} parent=1 // pred_region
      %s45 = ssub.s32 1024, 1024
      %46 = vsyncadd [#allocation6], %s45
      %s47 = sshll.u32 [#allocation7], 4
      %s48 = int_to_ptr.vmem [resolvable:$true] %s47
      %53 = dma.hbm_to_vmem [thread:$0]  %s3, 1024, %s48, [#allocation6], 128, 128, 8
    $region17: #{stacked_gru_pallas.1} parent=1 // pred_fallthru
      _
    // Predicated region
    $region18: #{stacked_gru_pallas.1} parent=1 // pred_check
      _
    $region19: #{stacked_gru_pallas.1} parent=1 // pred_check_branch
      %55 = sbr.rel (0) target = $region21
    $region20: #{stacked_gru_pallas.1} parent=1 // pred_region
      _
    $region21: #{stacked_gru_pallas.1} parent=1 // pred_fallthru
      _
    // Predicated region
    $region22: #{stacked_gru_pallas.1} parent=1 // pred_check
      _
    $region23: #{stacked_gru_pallas.1} parent=1 // pred_check_branch
      %57 = sbr.rel (0) target = $region25
    $region24: #{stacked_gru_pallas.1} parent=1 // pred_region
      %58 = dma.done [#allocation3], 256
    $region25: #{stacked_gru_pallas.1} parent=1 // pred_fallthru
      _
    // Predicated region
    $region26: #{stacked_gru_pallas.1} parent=1 // pred_check
      _
    $region27: #{stacked_gru_pallas.1} parent=1 // pred_check_branch
      %60 = sbr.rel (0) target = $region29
    $region28: #{stacked_gru_pallas.1} parent=1 // pred_region
      %61 = dma.done [#allocation6], 1024
    $region29: #{stacked_gru_pallas.1} parent=1 // pred_fallthru
      _
    // Predicated region
    $region30: #{stacked_gru_pallas.1} parent=1 // pred_check
      _
    $region31: #{stacked_gru_pallas.1} parent=1 // pred_check_branch
      %63 = sbr.rel (0) target = $region33
    $region32: #{stacked_gru_pallas.1} parent=1 // pred_region
      %64 = dma.done [#allocation6], 1024
    $region33: #{stacked_gru_pallas.1} parent=1 // pred_fallthru
      _
    %p65 = scmp.eq.s32.totalorder 0, 0
    // Predicated region
    $region34: #{stacked_gru_pallas.1} parent=1 // pred_check
      %p66 = pneg %p65
    $region35: #{stacked_gru_pallas.1} parent=1 // pred_check_branch
      %68 = sbr.rel (%p66) target = $region37
    $region36: #{stacked_gru_pallas.1} parent=1 // pred_region
      %v69 = vld [vmem:[#allocation2] sm:$0xff]
      %v70 = vld [vmem:[#allocation2 + $0x8] sm:$0xff]
      %vm71 = vcmask 261120
      %72 = vst.msk [vmem:[#allocation9] sm:$0xff] %vm71, %v69
      %73 = vst.msk [vmem:[#allocation9 + $0x8] sm:$0xff] %vm71, %v70
    $region37: #{stacked_gru_pallas.1} parent=1 // pred_fallthru
      _
    %v74 = vlaneseq
    %v75 = vshrl.u32 %v74, 7
    %vm76 = vcmp.lt.s32.totalorder %v75, 4
    %v77 = vld [vmem:[%s0] sm:$0xff]
    %v78 = vld [vmem:[#allocation9] sm:$0xff]
    %v79 = vld [vmem:[#allocation5] sm:$0xff]
    %v80 = vld [vmem:[#allocation5 + $0x8] sm:$0xff]
    %v81 = vld [vmem:[#allocation5 + $0x10] sm:$0xff]
    %v82 = vld [vmem:[#allocation5 + $0x18] sm:$0xff]
    %v83 = vld [vmem:[#allocation7] sm:$0xff]
    %v84 = vld [vmem:[#allocation7 + $0x8] sm:$0xff]
    %v85 = vld [vmem:[#allocation7 + $0x10] sm:$0xff]
    %v86 = vld [vmem:[#allocation7 + $0x18] sm:$0xff]
    %vm87 = vcmask 261120
    %v89 = vsel %vm87, %v78, 0
    %91 = vmatprep.subr.mxu0 0.0
    %92 = vmatpush1.msra.mxu0 %v83
    %93 = vmatprep.subr.mxu0 0.0
    %94 = vmatpush1.msra.mxu0 %v84
    %95 = vmatprep.subr.mxu0 0.0
    %96 = vmatpush1.msra.mxu0 %v85
    %97 = vmatprep.subr.mxu0 0.0
    %98 = vmatpush1.msra.mxu0 %v86
    %99 = vmatprep.subr.mxu0 0.0
    %100 = vmatpush1.msra.mxu0 0.0
    %101 = vmatprep.subr.mxu0 0.0
    %102 = vmatpush1.msra.mxu0 0.0
    %103 = vmatprep.subr.mxu0 0.0
    %104 = vmatpush1.msra.mxu0 0.0
    %105 = vmatprep.subr.mxu0 0.0
    %106 = vmatpush1.msra.mxu0 0.0
    %107 = vmatprep.subr.mxu0 0.0
    %108 = vmatpush1.msra.mxu0 0.0
    %109 = vmatprep.subr.mxu0 0.0
    %110 = vmatpush1.msra.mxu0 0.0
    %111 = vmatprep.subr.mxu0 0.0
    %112 = vmatpush1.msra.mxu0 0.0
    %113 = vmatprep.subr.mxu0 0.0
    %114 = vmatpush1.msra.mxu0 0.0
    %115 = vmatprep.subr.mxu0 0.0
    %116 = vmatpush1.msra.mxu0 0.0
    %117 = vmatprep.subr.mxu0 0.0
    %118 = vmatpush1.msra.mxu0 0.0
    %119 = vmatprep.subr.mxu0 0.0
    %120 = vmatpush1.msra.mxu0 0.0
    %121 = vmatprep.subr.mxu0 0.0
    %122 = vmatpush1.msra.mxu0 0.0
    %123 = vmatprep.subr.mxu0 0.0
    %124 = vmatpush1.msra.mxu0 0.0
    %125 = vmatprep.subr.mxu0 0.0
    %126 = vmatpush1.msra.mxu0 0.0
    %127 = vmatprep.subr.mxu0 0.0
    %128 = vmatpush1.msra.mxu0 0.0
    %129 = vmatprep.subr.mxu0 0.0
    %130 = vmatpush1.msra.mxu0 0.0
    %131 = vmatprep.subr.mxu0 0.0
    %132 = vmatpush1.msra.mxu0 0.0
    %133 = vmatprep.subr.mxu0 0.0
    %134 = vmatpush1.msra.mxu0 0.0
    %135 = vmatprep.subr.mxu0 0.0
    %136 = vmatpush1.msra.mxu0 0.0
    %137 = vmatprep.subr.mxu0 0.0
    %138 = vmatpush1.msra.mxu0 0.0
    %139 = vmatprep.subr.mxu0 0.0
    %140 = vmatpush1.msra.mxu0 0.0
    %141 = vmatprep.subr.mxu0 0.0
    %142 = vmatpush1.msra.mxu0 0.0
    %143 = vmatprep.subr.mxu0 0.0
    %144 = vmatpush1.msra.mxu0 0.0
    %145 = vmatprep.subr.mxu0 0.0
    %146 = vmatpush1.msra.mxu0 0.0
    %147 = vmatprep.subr.mxu0 0.0
    %148 = vmatpush1.msra.mxu0 0.0
    %149 = vmatprep.subr.mxu0 0.0
    %150 = vmatpush1.msra.mxu0 0.0
    %151 = vmatprep.subr.mxu0 0.0
    %152 = vmatpush1.msra.mxu0 0.0
    %153 = vmatprep.subr.mxu0 0.0
    %154 = vmatpush1.msra.mxu0 0.0
    %155 = vmatprep.mubr.f32.mxu0 0.0
    %156 = vmatmul.mubr.f32.gmra.mrb[0].mxu0 %v89
    %v157 = vpop.f32.mrb[0].mxu0
    %v158 = vadd.f32 0.0, %v157
    %v159 = vpop.f32.mrb[0].mxu0
    %160 = vdwg.mxu0
    %v162 = vsel %vm87, %v77, 0
    %164 = vmatprep.subr.mxu0 0.0
    %165 = vmatpush1.msra.mxu0 %v79
    %166 = vmatprep.subr.mxu0 0.0
    %167 = vmatpush1.msra.mxu0 %v80
    %168 = vmatprep.subr.mxu0 0.0
    %169 = vmatpush1.msra.mxu0 %v81
    %170 = vmatprep.subr.mxu0 0.0
    %171 = vmatpush1.msra.mxu0 %v82
    %172 = vmatprep.subr.mxu0 0.0
    %173 = vmatpush1.msra.mxu0 0.0
    %174 = vmatprep.subr.mxu0 0.0
    %175 = vmatpush1.msra.mxu0 0.0
    %176 = vmatprep.subr.mxu0 0.0
    %177 = vmatpush1.msra.mxu0 0.0
    %178 = vmatprep.subr.mxu0 0.0
    %179 = vmatpush1.msra.mxu0 0.0
    %180 = vmatprep.subr.mxu0 0.0
    %181 = vmatpush1.msra.mxu0 0.0
    %182 = vmatprep.subr.mxu0 0.0
    %183 = vmatpush1.msra.mxu0 0.0
    %184 = vmatprep.subr.mxu0 0.0
    %185 = vmatpush1.msra.mxu0 0.0
    %186 = vmatprep.subr.mxu0 0.0
    %187 = vmatpush1.msra.mxu0 0.0
    %188 = vmatprep.subr.mxu0 0.0
    %189 = vmatpush1.msra.mxu0 0.0
    %190 = vmatprep.subr.mxu0 0.0
    %191 = vmatpush1.msra.mxu0 0.0
    %192 = vmatprep.subr.mxu0 0.0
    %193 = vmatpush1.msra.mxu0 0.0
    %194 = vmatprep.subr.mxu0 0.0
    %195 = vmatpush1.msra.mxu0 0.0
    %196 = vmatprep.subr.mxu0 0.0
    %197 = vmatpush1.msra.mxu0 0.0
    %198 = vmatprep.subr.mxu0 0.0
    %199 = vmatpush1.msra.mxu0 0.0
    %200 = vmatprep.subr.mxu0 0.0
    %201 = vmatpush1.msra.mxu0 0.0
    %202 = vmatprep.subr.mxu0 0.0
    %203 = vmatpush1.msra.mxu0 0.0
    %204 = vmatprep.subr.mxu0 0.0
    %205 = vmatpush1.msra.mxu0 0.0
    %206 = vmatprep.subr.mxu0 0.0
    %207 = vmatpush1.msra.mxu0 0.0
    %208 = vmatprep.subr.mxu0 0.0
    %209 = vmatpush1.msra.mxu0 0.0
    %210 = vmatprep.subr.mxu0 0.0
    %211 = vmatpush1.msra.mxu0 0.0
    %212 = vmatprep.subr.mxu0 0.0
    %213 = vmatpush1.msra.mxu0 0.0
    %214 = vmatprep.subr.mxu0 0.0
    %215 = vmatpush1.msra.mxu0 0.0
    %216 = vmatprep.subr.mxu0 0.0
    %217 = vmatpush1.msra.mxu0 0.0
    %218 = vmatprep.subr.mxu0 0.0
    %219 = vmatpush1.msra.mxu0 0.0
    %220 = vmatprep.subr.mxu0 0.0
    %221 = vmatpush1.msra.mxu0 0.0
    %222 = vmatprep.subr.mxu0 0.0
    %223 = vmatpush1.msra.mxu0 0.0
    %224 = vmatprep.subr.mxu0 0.0
    %225 = vmatpush1.msra.mxu0 0.0
    %226 = vmatprep.subr.mxu0 0.0
    %227 = vmatpush1.msra.mxu0 0.0
    %228 = vmatprep.mubr.f32.mxu0 0.0
    %229 = vmatmul.mubr.f32.gmra.mrb[0].mxu0 %v162
    %v230 = vpop.f32.mrb[0].mxu0
    %v231 = vadd.f32 %v158, %v230
    %v232 = vpop.f32.mrb[0].mxu0
    %233 = vdwg.mxu0
    %v234 = vld [vmem:[%s4] sm:$0xff]
    %v235 = vadd.f32 %v231, %v234
    %v236 = vxor.u32 %v235, 2147483648
    %v237 = vmul.f32 %v236, 1.442695
    %v238 = vpow.pop %v237
    %v239 = vadd.f32 %v238, 1.0
    %v240 = vrcp.pop %v239
    %v241 = vmul.f32 1.0, %v240
    %243 = vrot.lane.b32.xlu0 %v235, 32
    %v244 = vpop.permute.xlu0 %243
    %v246 = vmul.f32 %v241, %v244
    %248 = vrot.lane.b32.xlu0 %v246, 64
    %v249 = vpop.permute.xlu0 %248
    %v251 = vadd.f32 %v235, %v249
    %v252 = vtanh.pop %v251
    %v253 = vsub.f32 1.0, %v241
    %255 = vrot.lane.b32.xlu0 %v252, 96
    %v256 = vpop.permute.xlu0 %255
    %v258 = vmul.f32 %v253, %v256
    %259 = vrot.lane.b32.xlu0 %v78, 32
    %v260 = vpop.permute.xlu0 %259
    %v262 = vmul.f32 %v241, %v260
    %v263 = vadd.f32 %v258, %v262
    %v264 = vsel %vm76, 1, 0
    %vm265 = vcmp.eq.s32.totalorder %v264, 1
    %v266 = vsel %vm265, %v263, 0.0
    %268 = vrot.lane.b32.xlu0 %v266, 96
    %v269 = vpop.permute.xlu0 %268
    %271 = vst.msk [vmem:[#allocation9] sm:$0xff] %vm87, %v269
    %s272 = scalar_lea.vmem [#allocation9], 8
    %v273 = vld [vmem:[%s272] sm:$0xff]
    %s274 = scalar_lea.vmem [#allocation5], 32
    %v275 = vld [vmem:[%s274] sm:$0xff]
    %v276 = vld [vmem:[%s274 + $0x8] sm:$0xff]
    %v277 = vld [vmem:[%s274 + $0x10] sm:$0xff]
    %v278 = vld [vmem:[%s274 + $0x18] sm:$0xff]
    %s279 = scalar_lea.vmem [#allocation7], 32
    %v280 = vld [vmem:[%s279] sm:$0xff]
    %v281 = vld [vmem:[%s279 + $0x8] sm:$0xff]
    %v282 = vld [vmem:[%s279 + $0x10] sm:$0xff]
    %v283 = vld [vmem:[%s279 + $0x18] sm:$0xff]
    %v285 = vsel %vm87, %v273, 0
    %287 = vmatprep.subr.mxu0 0.0
    %288 = vmatpush1.msra.mxu0 %v280
    %289 = vmatprep.subr.mxu0 0.0
    %290 = vmatpush1.msra.mxu0 %v281
    %291 = vmatprep.subr.mxu0 0.0
    %292 = vmatpush1.msra.mxu0 %v282
    %293 = vmatprep.subr.mxu0 0.0
    %294 = vmatpush1.msra.mxu0 %v283
    %295 = vmatprep.subr.mxu0 0.0
    %296 = vmatpush1.msra.mxu0 0.0
    %297 = vmatprep.subr.mxu0 0.0
    %298 = vmatpush1.msra.mxu0 0.0
    %299 = vmatprep.subr.mxu0 0.0
    %300 = vmatpush1.msra.mxu0 0.0
    %301 = vmatprep.subr.mxu0 0.0
    %302 = vmatpush1.msra.mxu0 0.0
    %303 = vmatprep.subr.mxu0 0.0
    %304 = vmatpush1.msra.mxu0 0.0
    %305 = vmatprep.subr.mxu0 0.0
    %306 = vmatpush1.msra.mxu0 0.0
    %307 = vmatprep.subr.mxu0 0.0
    %308 = vmatpush1.msra.mxu0 0.0
    %309 = vmatprep.subr.mxu0 0.0
    %310 = vmatpush1.msra.mxu0 0.0
    %311 = vmatprep.subr.mxu0 0.0
    %312 = vmatpush1.msra.mxu0 0.0
    %313 = vmatprep.subr.mxu0 0.0
    %314 = vmatpush1.msra.mxu0 0.0
    %315 = vmatprep.subr.mxu0 0.0
    %316 = vmatpush1.msra.mxu0 0.0
    %317 = vmatprep.subr.mxu0 0.0
    %318 = vmatpush1.msra.mxu0 0.0
    %319 = vmatprep.subr.mxu0 0.0
    %320 = vmatpush1.msra.mxu0 0.0
    %321 = vmatprep.subr.mxu0 0.0
    %322 = vmatpush1.msra.mxu0 0.0
    %323 = vmatprep.subr.mxu0 0.0
    %324 = vmatpush1.msra.mxu0 0.0
    %325 = vmatprep.subr.mxu0 0.0
    %326 = vmatpush1.msra.mxu0 0.0
    %327 = vmatprep.subr.mxu0 0.0
    %328 = vmatpush1.msra.mxu0 0.0
    %329 = vmatprep.subr.mxu0 0.0
    %330 = vmatpush1.msra.mxu0 0.0
    %331 = vmatprep.subr.mxu0 0.0
    %332 = vmatpush1.msra.mxu0 0.0
    %333 = vmatprep.subr.mxu0 0.0
    %334 = vmatpush1.msra.mxu0 0.0
    %335 = vmatprep.subr.mxu0 0.0
    %336 = vmatpush1.msra.mxu0 0.0
    %337 = vmatprep.subr.mxu0 0.0
    %338 = vmatpush1.msra.mxu0 0.0
    %339 = vmatprep.subr.mxu0 0.0
    %340 = vmatpush1.msra.mxu0 0.0
    %341 = vmatprep.subr.mxu0 0.0
    %342 = vmatpush1.msra.mxu0 0.0
    %343 = vmatprep.subr.mxu0 0.0
    %344 = vmatpush1.msra.mxu0 0.0
    %345 = vmatprep.subr.mxu0 0.0
    %346 = vmatpush1.msra.mxu0 0.0
    %347 = vmatprep.subr.mxu0 0.0
    %348 = vmatpush1.msra.mxu0 0.0
    %349 = vmatprep.subr.mxu0 0.0
    %350 = vmatpush1.msra.mxu0 0.0
    %351 = vmatprep.mubr.f32.mxu0 0.0
    %352 = vmatmul.mubr.f32.gmra.mrb[0].mxu0 %v285
    %v353 = vpop.f32.mrb[0].mxu0
    %v354 = vadd.f32 0.0, %v353
    %v355 = vpop.f32.mrb[0].mxu0
    %356 = vdwg.mxu0
    %v357 = vsel %vm87, %v269, 0
    %359 = vmatprep.subr.mxu0 0.0
    %360 = vmatpush1.msra.mxu0 %v275
    %361 = vmatprep.subr.mxu0 0.0
    %362 = vmatpush1.msra.mxu0 %v276
    %363 = vmatprep.subr.mxu0 0.0
    %364 = vmatpush1.msra.mxu0 %v277
    %365 = vmatprep.subr.mxu0 0.0
    %366 = vmatpush1.msra.mxu0 %v278
    %367 = vmatprep.subr.mxu0 0.0
    %368 = vmatpush1.msra.mxu0 0.0
    %369 = vmatprep.subr.mxu0 0.0
    %370 = vmatpush1.msra.mxu0 0.0
    %371 = vmatprep.subr.mxu0 0.0
    %372 = vmatpush1.msra.mxu0 0.0
    %373 = vmatprep.subr.mxu0 0.0
    %374 = vmatpush1.msra.mxu0 0.0
    %375 = vmatprep.subr.mxu0 0.0
    %376 = vmatpush1.msra.mxu0 0.0
    %377 = vmatprep.subr.mxu0 0.0
    %378 = vmatpush1.msra.mxu0 0.0
    %379 = vmatprep.subr.mxu0 0.0
    %380 = vmatpush1.msra.mxu0 0.0
    %381 = vmatprep.subr.mxu0 0.0
    %382 = vmatpush1.msra.mxu0 0.0
    %383 = vmatprep.subr.mxu0 0.0
    %384 = vmatpush1.msra.mxu0 0.0
    %385 = vmatprep.subr.mxu0 0.0
    %386 = vmatpush1.msra.mxu0 0.0
    %387 = vmatprep.subr.mxu0 0.0
    %388 = vmatpush1.msra.mxu0 0.0
    %389 = vmatprep.subr.mxu0 0.0
    %390 = vmatpush1.msra.mxu0 0.0
    %391 = vmatprep.subr.mxu0 0.0
    %392 = vmatpush1.msra.mxu0 0.0
    %393 = vmatprep.subr.mxu0 0.0
    %394 = vmatpush1.msra.mxu0 0.0
    %395 = vmatprep.subr.mxu0 0.0
    %396 = vmatpush1.msra.mxu0 0.0
    %397 = vmatprep.subr.mxu0 0.0
    %398 = vmatpush1.msra.mxu0 0.0
    %399 = vmatprep.subr.mxu0 0.0
    %400 = vmatpush1.msra.mxu0 0.0
    %401 = vmatprep.subr.mxu0 0.0
    %402 = vmatpush1.msra.mxu0 0.0
    %403 = vmatprep.subr.mxu0 0.0
    %404 = vmatpush1.msra.mxu0 0.0
    %405 = vmatprep.subr.mxu0 0.0
    %406 = vmatpush1.msra.mxu0 0.0
    %407 = vmatprep.subr.mxu0 0.0
    %408 = vmatpush1.msra.mxu0 0.0
    %409 = vmatprep.subr.mxu0 0.0
    %410 = vmatpush1.msra.mxu0 0.0
    %411 = vmatprep.subr.mxu0 0.0
    %412 = vmatpush1.msra.mxu0 0.0
    %413 = vmatprep.subr.mxu0 0.0
    %414 = vmatpush1.msra.mxu0 0.0
    %415 = vmatprep.subr.mxu0 0.0
    %416 = vmatpush1.msra.mxu0 0.0
    %417 = vmatprep.subr.mxu0 0.0
    %418 = vmatpush1.msra.mxu0 0.0
    %419 = vmatprep.subr.mxu0 0.0
    %420 = vmatpush1.msra.mxu0 0.0
    %421 = vmatprep.subr.mxu0 0.0
    %422 = vmatpush1.msra.mxu0 0.0
    %423 = vmatprep.mubr.f32.mxu0 0.0
    %424 = vmatmul.mubr.f32.gmra.mrb[0].mxu0 %v357
    %v425 = vpop.f32.mrb[0].mxu0
    %v426 = vadd.f32 %v354, %v425
    %v427 = vpop.f32.mrb[0].mxu0
    %428 = vdwg.mxu0
    %s429 = scalar_lea.vmem %s4, 8
    %v430 = vld [vmem:[%s429] sm:$0xff]
    %v431 = vadd.f32 %v426, %v430
    %v432 = vxor.u32 %v431, 2147483648
    %v433 = vmul.f32 %v432, 1.442695
    %v434 = vpow.pop %v433
    %v435 = vadd.f32 %v434, 1.0
    %v436 = vrcp.pop %v435
    %v437 = vmul.f32 1.0, %v436
    %439 = vrot.lane.b32.xlu0 %v431, 32
    %v440 = vpop.permute.xlu0 %439
    %v442 = vmul.f32 %v437, %v440
    %444 = vrot.lane.b32.xlu0 %v442, 64
    %v445 = vpop.permute.xlu0 %444
    %v447 = vadd.f32 %v431, %v445
    %v448 = vtanh.pop %v447
    %v449 = vsub.f32 1.0, %v437
    %451 = vrot.lane.b32.xlu0 %v448, 96
    %v452 = vpop.permute.xlu0 %451
    %v454 = vmul.f32 %v449, %v452
    %455 = vrot.lane.b32.xlu0 %v273, 32
    %v456 = vpop.permute.xlu0 %455
    %v458 = vmul.f32 %v437, %v456
    %v459 = vadd.f32 %v454, %v458
    %v460 = vsel %vm265, %v459, 0.0
    %462 = vrot.lane.b32.xlu0 %v460, 96
    %v463 = vpop.permute.xlu0 %462
    %465 = vst.msk [vmem:[%s272] sm:$0xff] %vm87, %v463
    %466 = vst.msk [vmem:[#allocation8] sm:$0xff] %vm87, %v463
    // Predicated region
    $region38: #{stacked_gru_pallas.1} parent=1 // pred_check
      _
    $region39: #{stacked_gru_pallas.1} parent=1 // pred_check_branch
      %468 = sbr.rel (0) target = $region41
    $region40: #{stacked_gru_pallas.1} parent=1 // pred_region
      %s470 = ssub.s32 128, 128
      %471 = vsyncadd [#allocation4], %s470
      %s473 = sshll.u32 [#allocation8], 4
      %s474 = int_to_ptr.vmem [resolvable:$true] %s473
      %476 = dma.vmem_to_hbm [thread:$0]  %s474, 128, %s5, [#allocation4]
    $region41: #{stacked_gru_pallas.1} parent=1 // pred_fallthru
      _
    // Predicated region
    $region42: #{stacked_gru_pallas.1} parent=1 // pred_check
      _
    $region43: #{stacked_gru_pallas.1} parent=1 // pred_check_branch
      %478 = sbr.rel (0) target = $region45
    $region44: #{stacked_gru_pallas.1} parent=1 // pred_region
      %s480 = ssub.s32 256, 256
      %481 = vsyncadd [#allocation10], %s480
      %s482 = sshll.u32 [#allocation9], 4
      %s483 = int_to_ptr.vmem [resolvable:$true] %s482
      %488 = dma.vmem_to_hbm [thread:$0]  %s483, 256, %s6, [#allocation10], 128, 128, 8
    $region45: #{stacked_gru_pallas.1} parent=1 // pred_fallthru
      _
    // Predicated region
    $region46: #{stacked_gru_pallas.1} parent=1 // pred_check
      _
    $region47: #{stacked_gru_pallas.1} parent=1 // pred_check_branch
      %490 = sbr.rel (0) target = $region49
    $region48: #{stacked_gru_pallas.1} parent=1 // pred_region
      %491 = dma.done [#allocation4], 128
    $region49: #{stacked_gru_pallas.1} parent=1 // pred_fallthru
      _
    // Predicated region
    $region50: #{stacked_gru_pallas.1} parent=1 // pred_check
      _
    $region51: #{stacked_gru_pallas.1} parent=1 // pred_check_branch
      %493 = sbr.rel (0) target = $region53
    $region52: #{stacked_gru_pallas.1} parent=1 // pred_region
      %494 = dma.done [#allocation10], 256
    $region53: #{stacked_gru_pallas.1} parent=1 // pred_fallthru
      _
    %495 = vsyncpa [#allocation3], 1
    %496 = vsyncpa [#allocation6], 1
    %497 = vsyncpa [#allocation4], 1
    %498 = vsyncpa [#allocation10], 1

</llo_original>
